<compile_context>
chip_gen: v6e
topology: v6e:2x2x1
jax: 0.10.0
libtpu: 0.0.40
codegen_flags: <defaults>
</compile_context>

<pallas_src>
import jax
import jax.numpy as jnp
from jax.experimental import pallas as pl
from jax.experimental.pallas import tpu as pltpu


# ---------------------------------------------------------------------------
# Kernel: element-wise affine + leaky_relu (x2) on a lane-dense (rows, lanes)
# tile.  Columns (TR, 1) broadcast over the lane dimension.
# ---------------------------------------------------------------------------
def dfblk_kernel(g0_ref, b0_ref, g1_ref, b1_ref, x_ref, o_ref):
    x = x_ref[...].astype(jnp.float32)          # (TR, TL)
    h = g0_ref[...] * x + b0_ref[...]           # (TR, 1) broadcast over lanes
    h = jnp.maximum(h, 0.2 * h)                 # leaky_relu(0.2): single vmax
    h = g1_ref[...] * h + b1_ref[...]
    h = jnp.maximum(h, 0.2 * h)
    o_ref[...] = h.astype(o_ref.dtype)


def _pick_tiles(rows, lanes, itemsize, target_bytes=2 * 1024 * 1024):
    """Choose (TR, TL): (8,128)-aligned, divide evenly, ~target_bytes/block."""
    # Lane tile: a multiple of 128 that divides `lanes`, capped at 2048.
    if lanes % 128 == 0:
        tl = min(lanes, 2048)
        while lanes % tl != 0:
            tl -= 128
    else:
        tl = lanes                               # full extent (odd spatial size)
    # Row tile: a multiple of 8 that divides `rows`, capped by block budget.
    if rows % 8 == 0:
        max_rows = max(8, target_bytes // max(1, tl * itemsize))
        tr = max(8, min(rows, (max_rows // 8) * 8))
        while rows % tr != 0:
            tr -= 8
    else:
        tr = rows                                # full extent
    return tr, tl


def dfblk_forward(x, y, params):
    """x: (B, C, H, W) float32, y: (B, cond_dim) float32 -> (B, C, H, W)."""
    B, C, H, W = x.shape
    HW = H * W
    BC = B * C

    # ---- Conditioning MLPs: one batched pass for the whole call (plain XLA).
    # Branch order: gamma0, beta0, gamma1, beta1.
    w1 = jnp.stack([params["a0_g_w1"], params["a0_b_w1"],
                    params["a1_g_w1"], params["a1_b_w1"]])    # (4, cond, C)
    b1 = jnp.stack([params["a0_g_b1"], params["a0_b_b1"],
                    params["a1_g_b1"], params["a1_b_b1"]])    # (4, 1, C)
    w2 = jnp.stack([params["a0_g_w2"], params["a0_b_w2"],
                    params["a1_g_w2"], params["a1_b_w2"]])    # (4, C, C)
    b2 = jnp.stack([params["a0_g_b2"], params["a0_b_b2"],
                    params["a1_g_b2"], params["a1_b_b2"]])    # (4, 1, C)

    hid = jnp.maximum(jnp.einsum("bd,kdc->kbc", y, w1) + b1, 0.0)   # (4, B, C)
    affine = jnp.einsum("kbc,kce->kbe", hid, w2) + b2               # (4, B, C)
    # (B, C) -> (B*C, 1) columns; row order b*C + c matches x.reshape(B*C, HW).
    g0, be0, g1, be1 = (a.reshape(BC, 1).astype(jnp.float32) for a in affine)

    # ---- Element-wise pass: lane-dense (B*C, HW) tiling.
    x2 = x.reshape(BC, HW)
    tr, tl = _pick_tiles(BC, HW, x2.dtype.itemsize)
    grid = (pl.cdiv(BC, tr), pl.cdiv(HW, tl))

    # Column blocks depend only on the row grid index -> fetched once per row
    # block, reused across the lane axis.
    col_spec = pl.BlockSpec((tr, 1), lambda i, j: (i, 0))
    tile_spec = pl.BlockSpec((tr, tl), lambda i, j: (i, j))

    cost = pl.CostEstimate(
        flops=6 * BC * HW,                       # 2 affine (mul+add) + 2 (mul+max)
        transcendentals=0,
        bytes_accessed=2 * BC * HW * x2.dtype.itemsize + 4 * BC * 4,
    )

    out = pl.pallas_call(
        dfblk_kernel,
        out_shape=jax.ShapeDtypeStruct((BC, HW), x.dtype),
        grid=grid,
        in_specs=[col_spec, col_spec, col_spec, col_spec, tile_spec],
        out_specs=tile_spec,
        compiler_params=pltpu.CompilerParams(
            # Row and lane tiles are independent -> shard both across cores.
            dimension_semantics=("parallel", "parallel"),
            # Blocks capped at ~2 MiB; double-buffered in+out ~ 8 MiB, well
            # under the 32 MiB scoped-VMEM default (and v7x 64 MiB physical).
            vmem_limit_bytes=32 * 1024 * 1024,
        ),
        cost_estimate=cost,
    )(g0, be0, g1, be1, x2)

    return out.reshape(B, C, H, W)


# ---------------------------------------------------------------------------
# Deterministic parameter init (biases stored as (1, C) for easy stacking).
# ---------------------------------------------------------------------------
def init_params(key, cond_dim, in_ch):
    keys = jax.random.split(key, 16)
    ki = iter(keys)

    def linear_w(k, fan_in, fan_out):
        bound = 1.0 / jnp.sqrt(fan_in)
        return jax.random.uniform(k, (fan_in, fan_out), jnp.float32, -bound, bound)

    p = {}
    for blk in ("a0", "a1"):
        for branch in ("g", "b"):
            p[f"{blk}_{branch}_w1"] = linear_w(next(ki), cond_dim, in_ch)
            p[f"{blk}_{branch}_b1"] = jax.random.uniform(
                next(ki), (1, in_ch), jnp.float32, -0.1, 0.1)
            p[f"{blk}_{branch}_w2"] = linear_w(next(ki), in_ch, in_ch)
            p[f"{blk}_{branch}_b2"] = jax.random.uniform(
                next(ki), (1, in_ch), jnp.float32, -0.1, 0.1)
    return p


# ---------------------------------------------------------------------------
# Pure-JAX reference of the PyTorch forward, for verification.
# ---------------------------------------------------------------------------
def dfblk_reference(x, y, params):
    def mlp(y, w1, b1, w2, b2):
        h = jnp.maximum(y @ w1 + b1, 0.0)
        return h @ w2 + b2

    def lrelu(v):
        return jnp.where(v > 0, v, 0.2 * v)

    g0 = mlp(y, params["a0_g_w1"], params["a0_g_b1"], params["a0_g_w2"], params["a0_g_b2"])
    be0 = mlp(y, params["a0_b_w1"], params["a0_b_b1"], params["a0_b_w2"], params["a0_b_b2"])
    g1 = mlp(y, params["a1_g_w1"], params["a1_g_b1"], params["a1_g_w2"], params["a1_g_b2"])
    be1 = mlp(y, params["a1_b_w1"], params["a1_b_b1"], params["a1_b_w2"], params["a1_b_b2"])

    h = lrelu(g0[:, :, None, None] * x + be0[:, :, None, None])
    h = lrelu(g1[:, :, None, None] * h + be1[:, :, None, None])
    return h


if __name__ == "__main__":
    B, C, H, W = 2, 4, 16, 16
    cond_dim = 32

    key = jax.random.PRNGKey(0)
    kx, ky, kp = jax.random.split(key, 3)
    x = jax.random.normal(kx, (B, C, H, W), jnp.float32)
    y = jax.random.normal(ky, (B, cond_dim), jnp.float32)
    params = init_params(kp, cond_dim, C)

    out = jax.block_until_ready(dfblk_forward(x, y, params))

    ref = dfblk_reference(x, y, params)
    assert out.shape == (B, C, H, W)
    assert jnp.allclose(out, ref, atol=1e-5, rtol=1e-5), "mismatch vs reference"

    print("KERNEL_OK")
</pallas_src>

<mosaic_0001>
module attributes {stable_mosaic.version = 11 : i64} {
  func.func @dfblk_kernel(%arg0: i32, %arg1: i32, %arg2: memref<8x1xf32, #tpu.memory_space<vmem>>, %arg3: memref<8x1xf32, #tpu.memory_space<vmem>>, %arg4: memref<8x1xf32, #tpu.memory_space<vmem>>, %arg5: memref<8x1xf32, #tpu.memory_space<vmem>>, %arg6: memref<8x256xf32, #tpu.memory_space<vmem>>, %arg7: memref<8x256xf32, #tpu.memory_space<vmem>>) attributes {dimension_semantics = [#tpu.dimension_semantics<parallel>, #tpu.dimension_semantics<parallel>], iteration_bounds = array<i64: 1, 1>, scalar_prefetch = 0 : i64, scratch_operands = 0 : i64, tpu.core_type = #tpu.core_type<tc>, window_params = [{transform_indices = @transform_0, window_bounds = array<i64: 8, 1>}, {transform_indices = @transform_1, window_bounds = array<i64: 8, 1>}, {transform_indices = @transform_2, window_bounds = array<i64: 8, 1>}, {transform_indices = @transform_3, window_bounds = array<i64: 8, 1>}, {transform_indices = @transform_4, window_bounds = array<i64: 8, 256>}, {transform_indices = @transform_5, window_bounds = array<i64: 8, 256>}]} {
    %c0 = arith.constant 0 : index
    %c0_0 = arith.constant 0 : index
    %0 = vector.load %arg6[%c0, %c0_0] : memref<8x256xf32, #tpu.memory_space<vmem>>, vector<8x256xf32>
    %c0_1 = arith.constant 0 : index
    %c0_2 = arith.constant 0 : index
    %1 = vector.load %arg2[%c0_1, %c0_2] : memref<8x1xf32, #tpu.memory_space<vmem>>, vector<8x1xf32>
    %2 = vector.broadcast %1 : vector<8x1xf32> to vector<8x256xf32>
    %3 = arith.mulf %2, %0 : vector<8x256xf32>
    %c0_3 = arith.constant 0 : index
    %c0_4 = arith.constant 0 : index
    %4 = vector.load %arg3[%c0_3, %c0_4] : memref<8x1xf32, #tpu.memory_space<vmem>>, vector<8x1xf32>
    %5 = vector.broadcast %4 : vector<8x1xf32> to vector<8x256xf32>
    %6 = arith.addf %3, %5 : vector<8x256xf32>
    %cst = arith.constant 2.000000e-01 : f32
    %7 = vector.broadcast %cst : f32 to vector<8x256xf32>
    %8 = arith.mulf %7, %6 : vector<8x256xf32>
    %9 = arith.maximumf %6, %8 : vector<8x256xf32>
    %c0_5 = arith.constant 0 : index
    %c0_6 = arith.constant 0 : index
    %10 = vector.load %arg4[%c0_5, %c0_6] : memref<8x1xf32, #tpu.memory_space<vmem>>, vector<8x1xf32>
    %11 = vector.broadcast %10 : vector<8x1xf32> to vector<8x256xf32>
    %12 = arith.mulf %11, %9 : vector<8x256xf32>
    %c0_7 = arith.constant 0 : index
    %c0_8 = arith.constant 0 : index
    %13 = vector.load %arg5[%c0_7, %c0_8] : memref<8x1xf32, #tpu.memory_space<vmem>>, vector<8x1xf32>
    %14 = vector.broadcast %13 : vector<8x1xf32> to vector<8x256xf32>
    %15 = arith.addf %12, %14 : vector<8x256xf32>
    %cst_9 = arith.constant 2.000000e-01 : f32
    %16 = vector.broadcast %cst_9 : f32 to vector<8x256xf32>
    %17 = arith.mulf %16, %15 : vector<8x256xf32>
    %18 = arith.maximumf %15, %17 : vector<8x256xf32>
    %c0_10 = arith.constant 0 : index
    %c0_11 = arith.constant 0 : index
    %19 = vector.load %arg7[%c0_10, %c0_11] : memref<8x256xf32, #tpu.memory_space<vmem>>, vector<8x256xf32>
    tpu.vector_store %arg7[%c0_10, %c0_11], %18 {strides = array<i32>} : memref<8x256xf32, #tpu.memory_space<vmem>>, vector<8x256xf32>,
    return
  }
  func.func @transform_0(%arg0: i32, %arg1: i32) -> (i32, i32) {
    %c0_i32 = arith.constant 0 : i32
    %c0_i32_0 = arith.constant 0 : i32
    return %arg0, %c0_i32 : i32, i32
  }
  func.func @transform_1(%arg0: i32, %arg1: i32) -> (i32, i32) {
    %c0_i32 = arith.constant 0 : i32
    %c0_i32_0 = arith.constant 0 : i32
    return %arg0, %c0_i32 : i32, i32
  }
  func.func @transform_2(%arg0: i32, %arg1: i32) -> (i32, i32) {
    %c0_i32 = arith.constant 0 : i32
    %c0_i32_0 = arith.constant 0 : i32
    return %arg0, %c0_i32 : i32, i32
  }
  func.func @transform_3(%arg0: i32, %arg1: i32) -> (i32, i32) {
    %c0_i32 = arith.constant 0 : i32
    %c0_i32_0 = arith.constant 0 : i32
    return %arg0, %c0_i32 : i32, i32
  }
  func.func @transform_4(%arg0: i32, %arg1: i32) -> (i32, i32) {
    %c0_i32 = arith.constant 0 : i32
    return %arg0, %arg1 : i32, i32
  }
  func.func @transform_5(%arg0: i32, %arg1: i32) -> (i32, i32) {
    %c0_i32 = arith.constant 0 : i32
    return %arg0, %arg1 : i32, i32
  }
}

</mosaic_0001>

<llo_original>
// kernel: tpu_custom_call.1
$region0: #{tpu_custom_call.1}
  #allocation0 [shape = 'u32[]', space=smem, size = 0x4, offset = 0x4, fixed_abs, tag = 'smem constant byte address 0x4 - core index']
  #allocation1 [shape = 'u32[144,128]{1,0:T(1,128)}', space=vmem, size = 0x12000, scoped, tag = 'internal scratch']
  %s0 = inlined_call_operand.vmem [shape: f32[8,1], index: 0, kind: input, shape index: {}]
  %s1 = inlined_call_operand.vmem [shape: f32[8,1], index: 1, kind: input, shape index: {}]
  %s2 = inlined_call_operand.vmem [shape: f32[8,1], index: 2, kind: input, shape index: {}]
  %s3 = inlined_call_operand.vmem [shape: f32[8,1], index: 3, kind: input, shape index: {}]
  %s4 = inlined_call_operand.vmem [shape: f32[8,256], index: 4, kind: input, shape index: {}]
  %s5 = inlined_call_operand.hbm [shape: f32[8,256], index: 5, kind: output, shape index: {}]
  %s6 = sld [smem:[#allocation0]]
  $region30: #{tpu_custom_call.1} parent=0
    _
  %s8 = ssub.s32 1, %s6
  %s9 = scalar_select 0, %s8, %s6
  $region1: #{tpu_custom_call.1} parent=0
    #allocation2 [shape = 'u8[8192]{0}', space=vmem, size = 0x2000, scoped, tag = 'output window, operand 0, single buffered']
    #allocation3 [shape = 's32[1]{0}', space=sflag, size = 0x4, scoped, tag = 'scoped memory for tpu_custom_call.1']
    %10 = vsyncpa [#allocation3], 0
    // Predicated region
    $region2: #{tpu_custom_call.1} parent=1 // pred_check
      _
    $region3: #{tpu_custom_call.1} parent=1 // pred_check_branch
      %12 = sbr.rel (0) target = $region5
    $region4: #{tpu_custom_call.1} parent=1 // pred_region
      _
    $region5: #{tpu_custom_call.1} parent=1 // pred_fallthru
      _
    // Predicated region
    $region6: #{tpu_custom_call.1} parent=1 // pred_check
      _
    $region7: #{tpu_custom_call.1} parent=1 // pred_check_branch
      %14 = sbr.rel (0) target = $region9
    $region8: #{tpu_custom_call.1} parent=1 // pred_region
      _
    $region9: #{tpu_custom_call.1} parent=1 // pred_fallthru
      _
    // Predicated region
    $region10: #{tpu_custom_call.1} parent=1 // pred_check
      _
    $region11: #{tpu_custom_call.1} parent=1 // pred_check_branch
      %16 = sbr.rel (0) target = $region13
    $region12: #{tpu_custom_call.1} parent=1 // pred_region
      _
    $region13: #{tpu_custom_call.1} parent=1 // pred_fallthru
      _
    // Predicated region
    $region14: #{tpu_custom_call.1} parent=1 // pred_check
      _
    $region15: #{tpu_custom_call.1} parent=1 // pred_check_branch
      %18 = sbr.rel (0) target = $region17
    $region16: #{tpu_custom_call.1} parent=1 // pred_region
      _
    $region17: #{tpu_custom_call.1} parent=1 // pred_fallthru
      _
    // Predicated region
    $region18: #{tpu_custom_call.1} parent=1 // pred_check
      _
    $region19: #{tpu_custom_call.1} parent=1 // pred_check_branch
      %20 = sbr.rel (0) target = $region21
    $region20: #{tpu_custom_call.1} parent=1 // pred_region
      _
    $region21: #{tpu_custom_call.1} parent=1 // pred_fallthru
      _
    %v21 = vld [vmem:[%s4] sm:$0xff]
    %v22 = vld [vmem:[%s4 + $0x8] sm:$0xff]
    %v23 = vld [vmem:[%s0] sm:$0xff]
    %25 = vset.pattern.permute.xlu0 0
    %26 = vperm.xlu0 %25, %v23
    %v27 = vpop.permute.xlu0 %26
    %v29 = vmul.f32 %v27, %v21
    %v30 = vmul.f32 %v27, %v22
    %v31 = vld [vmem:[%s1] sm:$0xff]
    %33 = vset.pattern.permute.xlu0 0
    %34 = vperm.xlu0 %33, %v31
    %v35 = vpop.permute.xlu0 %34
    %v37 = vadd.f32 %v29, %v35
    %v38 = vadd.f32 %v30, %v35
    %v39 = vmul.f32 %v37, 0.2
    %v40 = vmul.f32 %v38, 0.2
    %v41 = vmax.f32 %v37, %v39
    %v42 = vmax.f32 %v38, %v40
    %v43 = vld [vmem:[%s2] sm:$0xff]
    %45 = vset.pattern.permute.xlu0 0
    %46 = vperm.xlu0 %45, %v43
    %v47 = vpop.permute.xlu0 %46
    %v49 = vmul.f32 %v47, %v41
    %v50 = vmul.f32 %v47, %v42
    %v51 = vld [vmem:[%s3] sm:$0xff]
    %53 = vset.pattern.permute.xlu0 0
    %54 = vperm.xlu0 %53, %v51
    %v55 = vpop.permute.xlu0 %54
    %v57 = vadd.f32 %v49, %v55
    %v58 = vadd.f32 %v50, %v55
    %v59 = vmul.f32 %v57, 0.2
    %v60 = vmul.f32 %v58, 0.2
    %v61 = vmax.f32 %v57, %v59
    %v62 = vmax.f32 %v58, %v60
    %63 = vst [vmem:[#allocation2] sm:$0xff] %v61
    %64 = vst [vmem:[#allocation2 + $0x8] sm:$0xff] %v62
    // Predicated region
    $region22: #{tpu_custom_call.1} parent=1 // pred_check
      _
    $region23: #{tpu_custom_call.1} parent=1 // pred_check_branch
      %66 = sbr.rel (0) target = $region25
    $region24: #{tpu_custom_call.1} parent=1 // pred_region
      %s68 = ssub.s32 256, 256
      %69 = vsyncadd [#allocation3], %s68
      %s71 = sshll.u32 [#allocation2], 4
      %s72 = int_to_ptr.vmem [resolvable:$true] %s71
      %74 = dma.vmem_to_hbm [thread:$0]  %s72, 256, %s5, [#allocation3]
    $region25: #{tpu_custom_call.1} parent=1 // pred_fallthru
      _
    // Predicated region
    $region26: #{tpu_custom_call.1} parent=1 // pred_check
      _
    $region27: #{tpu_custom_call.1} parent=1 // pred_check_branch
      %76 = sbr.rel (0) target = $region29
    $region28: #{tpu_custom_call.1} parent=1 // pred_region
      %77 = dma.done [#allocation3], 256
    $region29: #{tpu_custom_call.1} parent=1 // pred_fallthru
      _
    %78 = vsyncpa [#allocation3], 1

</llo_original>
